<compile_context>
chip_gen: v7x
topology: tpu7x:2x2x1
jax: 0.10.0
libtpu: 0.0.40
codegen_flags: <defaults>
</compile_context>

<pallas_src>
import functools

import jax
import jax.numpy as jnp
from jax.experimental import pallas as pl
from jax.experimental.pallas import tpu as pltpu


def _round_up(x, m):
    return (x + m - 1) // m * m


# -----------------------------------------------------------------------------
# Kernel: one grid step == one RNN time step.  The hidden state is carried in
# the `comb_ref` VMEM scratch (columns [ip:]), the current X tile is written to
# columns [:ip], and a single merged matmul produces the pre-activation.
# -----------------------------------------------------------------------------
def rnn_seq_kernel(x_ref, h0_ref, w_in_ref, b_in_ref, w_out_ref, b_out_ref,
                   ht_out_ref, y_out_ref, comb_ref, *, ip):
    t = pl.program_id(0)

    # Seed the recurrent half of the combined buffer with Ht(-1) once.
    @pl.when(t == 0)
    def _():
        comb_ref[:, ip:] = h0_ref[...]

    # Write this step's X block (bf16) into the static, lane-aligned X half.
    comb_ref[:, :ip] = x_ref[0]

    # x_layer: one merged matmul  (Bp, Ip+Hp) @ (Ip+Hp, Hp)  -> f32 accumulator.
    pre = (jnp.dot(comb_ref[...], w_in_ref[...],
                   preferred_element_type=jnp.float32)
           + b_in_ref[...])                      # (1, Hp) bias broadcasts
    ht = jnp.maximum(pre, 0.0)                   # ReLU in f32

    # dropout -> identity (inference)

    # output_layer: (Bp, Hp) @ (Hp, Op) -> f32 accumulator.
    y = (jnp.dot(ht.astype(w_out_ref.dtype), w_out_ref[...],
                 preferred_element_type=jnp.float32)
         + b_out_ref[...])

    # Carry Ht for the next time step (bf16 in the resident scratch).
    comb_ref[:, ip:] = ht.astype(comb_ref.dtype)

    # Lane-dense (Hp=128 / Op=128) f32 stores.
    ht_out_ref[0, :, :] = ht
    y_out_ref[0, :, :] = y


# -----------------------------------------------------------------------------
# One-time parameter packing (hoisted out of the per-call path).
#   Wx: (H, I+H), bx: (H,), Wo: (O, H), bo: (O,)  -- PyTorch nn.Linear layout.
# Splitting Wx into its X-columns and H-columns and stacking them (pre-
# transposed) into one (Ip+Hp, Hp) matrix is mathematically identical to
# cat([X, Ht1], 1) @ Wx.T; zero padding keeps the products exact.
# -----------------------------------------------------------------------------
def pack_params(Wx, bx, Wo, bo, input_size, lane=128):
    H = Wx.shape[0]
    O = Wo.shape[0]
    I = input_size
    Ip, Hp, Op = _round_up(I, lane), _round_up(H, lane), _round_up(O, lane)
    Kp = Ip + Hp

    Wx_x = Wx[:, :I].T                                   # (I, H)
    Wx_h = Wx[:, I:].T                                   # (H, H)

    W_in = jnp.zeros((Kp, Hp), jnp.float32)
    W_in = W_in.at[:I, :H].set(Wx_x)
    W_in = W_in.at[Ip:Ip + H, :H].set(Wx_h)
    b_in = jnp.zeros((1, Hp), jnp.float32).at[0, :H].set(bx)

    W_out = jnp.zeros((Hp, Op), jnp.float32).at[:H, :O].set(Wo.T)
    b_out = jnp.zeros((1, Op), jnp.float32).at[0, :O].set(bo)

    return {
        "W_in": W_in.astype(jnp.bfloat16),
        "b_in": b_in,
        "W_out": W_out.astype(jnp.bfloat16),
        "b_out": b_out,
        "dims": (I, H, O, Ip, Hp, Op, Kp),
    }


# -----------------------------------------------------------------------------
# Fused multi-timestep forward: X_seq (T, B, I), H0 (B, H)
#   -> Ht_seq (T, B, H), out_seq (T, B, O)
# -----------------------------------------------------------------------------
def rnn_forward_sequence(X_seq, H0, params):
    I, H, O, Ip, Hp, Op, Kp = params["dims"]
    T, B, _ = X_seq.shape
    Bp = _round_up(B, 8)

    # Zero-pad inputs to TPU-friendly tiles (zeros keep the matmuls exact).
    Xp = jnp.pad(X_seq.astype(jnp.bfloat16),
                 ((0, 0), (0, Bp - B), (0, Ip - I)))
    H0p = jnp.pad(H0.astype(jnp.bfloat16), ((0, Bp - B), (0, Hp - H)))

    kernel = functools.partial(rnn_seq_kernel, ip=Ip)

    grid_spec = pltpu.PrefetchScalarGridSpec(
        num_scalar_prefetch=0,
        grid=(T,),
        in_specs=[
            # X[t]: re-fetched each step.
            pl.BlockSpec((1, Bp, Ip), lambda t: (t, 0, 0)),
            # H0 and all parameters: constant block index -> DMA'd once,
            # VMEM-resident for the entire time loop.
            pl.BlockSpec((Bp, Hp), lambda t: (0, 0)),
            pl.BlockSpec((Kp, Hp), lambda t: (0, 0)),
            pl.BlockSpec((1, Hp), lambda t: (0, 0)),
            pl.BlockSpec((Hp, Op), lambda t: (0, 0)),
            pl.BlockSpec((1, Op), lambda t: (0, 0)),
        ],
        out_specs=[
            pl.BlockSpec((1, Bp, Hp), lambda t: (t, 0, 0)),
            pl.BlockSpec((1, Bp, Op), lambda t: (t, 0, 0)),
        ],
        scratch_shapes=[pltpu.VMEM((Bp, Kp), jnp.bfloat16)],  # [X | Ht] carry
    )

    ht_seq, y_seq = pl.pallas_call(
        kernel,
        out_shape=(
            jax.ShapeDtypeStruct((T, Bp, Hp), jnp.float32),
            jax.ShapeDtypeStruct((T, Bp, Op), jnp.float32),
        ),
        grid_spec=grid_spec,
        compiler_params=pltpu.CompilerParams(
            dimension_semantics=("arbitrary",)),   # recurrence: sequential
    )(Xp, H0p, params["W_in"], params["b_in"], params["W_out"], params["b_out"])

    return ht_seq[:, :B, :H], y_seq[:, :B, :O]


def rnn_forward(X, Ht1, params):
    """Exact module forward signature: one time step (X, Ht1) -> (Ht, output)."""
    ht_seq, out_seq = rnn_forward_sequence(X[None], Ht1, params)
    return ht_seq[0], out_seq[0]


# -----------------------------------------------------------------------------
# References (plain JAX).  emulate_bf16=True mirrors the kernel's bf16 casts
# (weights/activations bf16, f32 accumulation) for a tight numerical check.
# -----------------------------------------------------------------------------
def ref_forward_sequence(X_seq, H0, Wx, bx, Wo, bo, emulate_bf16=False):
    if emulate_bf16:
        cast = lambda a: a.astype(jnp.bfloat16).astype(jnp.float32)
    else:
        cast = lambda a: a
    Wx_c, Wo_c = cast(Wx), cast(Wo)
    h = cast(H0)
    hts, outs = [], []
    for t in range(X_seq.shape[0]):
        combined = jnp.concatenate([cast(X_seq[t]), h], axis=1)
        ht = jnp.maximum(combined @ Wx_c.T + bx, 0.0)
        out = cast(ht) @ Wo_c.T + bo
        hts.append(ht)
        outs.append(out)
        h = cast(ht)
    return jnp.stack(hts), jnp.stack(outs)


if __name__ == "__main__":
    # Small shapes consistent with the module's forward.
    B, input_size, hidden_size, output_size, T = 8, 16, 32, 4, 6

    key = jax.random.PRNGKey(0)
    k_x, k_h, k_wx, k_bx, k_wo, k_bo = jax.random.split(key, 6)

    X_seq = jax.random.normal(k_x, (T, B, input_size), dtype=jnp.float32)
    H0 = jax.random.normal(k_h, (B, hidden_size), dtype=jnp.float32)

    # Deterministic parameters (same shapes as nn.Linear in __init__).
    Wx = 0.1 * jax.random.normal(
        k_wx, (hidden_size, input_size + hidden_size), dtype=jnp.float32)
    bx = 0.1 * jax.random.normal(k_bx, (hidden_size,), dtype=jnp.float32)
    Wo = 0.1 * jax.random.normal(
        k_wo, (output_size, hidden_size), dtype=jnp.float32)
    bo = 0.1 * jax.random.normal(k_bo, (output_size,), dtype=jnp.float32)

    # One-time packing (split/transpose/pad/bf16) -- NOT in the per-call path.
    params = pack_params(Wx, bx, Wo, bo, input_size)

    # Fused T-step forward (the performance path).
    ht_seq, out_seq = rnn_forward_sequence(X_seq, H0, params)
    jax.block_until_ready((ht_seq, out_seq))

    # Single-step forward (exact module signature), reuses the same kernel.
    ht1, out1 = rnn_forward(X_seq[0], H0, params)
    jax.block_until_ready((ht1, out1))

    # Tight check against a reference that emulates the kernel's bf16 casts.
    ht_ref_b, out_ref_b = ref_forward_sequence(
        X_seq, H0, Wx, bx, Wo, bo, emulate_bf16=True)
    assert jnp.allclose(ht_seq, ht_ref_b, atol=5e-3, rtol=5e-3)
    assert jnp.allclose(out_seq, out_ref_b, atol=5e-3, rtol=5e-3)
    assert jnp.allclose(ht1, ht_ref_b[0], atol=5e-3, rtol=5e-3)
    assert jnp.allclose(out1, out_ref_b[0], atol=5e-3, rtol=5e-3)

    # Loose check against the exact f32 PyTorch-semantics reference
    # (difference is purely the bf16 weight/activation quantization).
    ht_ref_f, out_ref_f = ref_forward_sequence(
        X_seq, H0, Wx, bx, Wo, bo, emulate_bf16=False)
    assert jnp.allclose(ht_seq, ht_ref_f, atol=5e-2, rtol=5e-2)
    assert jnp.allclose(out_seq, out_ref_f, atol=5e-2, rtol=5e-2)

    print("KERNEL_OK")
</pallas_src>

<mosaic_0001>
module attributes {stable_mosaic.version = 11 : i64} {
  func.func @rnn_seq_kernel(%arg0: i32, %arg1: memref<1x8x128xbf16, #tpu.memory_space<vmem>>, %arg2: memref<8x128xbf16, #tpu.memory_space<vmem>>, %arg3: memref<256x128xbf16, #tpu.memory_space<vmem>>, %arg4: memref<1x128xf32, #tpu.memory_space<vmem>>, %arg5: memref<128x128xbf16, #tpu.memory_space<vmem>>, %arg6: memref<1x128xf32, #tpu.memory_space<vmem>>, %arg7: memref<1x8x128xf32, #tpu.memory_space<vmem>>, %arg8: memref<1x8x128xf32, #tpu.memory_space<vmem>>, %arg9: memref<8x256xbf16, #tpu.memory_space<vmem>>) attributes {dimension_semantics = [#tpu.dimension_semantics<arbitrary>], iteration_bounds = array<i64: 6>, scalar_prefetch = 0 : i64, scratch_operands = 1 : i64, tpu.core_type = #tpu.core_type<tc>, window_params = [{transform_indices = @transform_0, window_bounds = array<i64: 1, 8, 128>}, {pipeline_mode = #tpu.pipeline_mode<synchronous>, transform_indices = @transform_1, window_bounds = array<i64: 8, 128>}, {pipeline_mode = #tpu.pipeline_mode<synchronous>, transform_indices = @transform_2, window_bounds = array<i64: 256, 128>}, {pipeline_mode = #tpu.pipeline_mode<synchronous>, transform_indices = @transform_3, window_bounds = array<i64: 1, 128>}, {pipeline_mode = #tpu.pipeline_mode<synchronous>, transform_indices = @transform_4, window_bounds = array<i64: 128, 128>}, {pipeline_mode = #tpu.pipeline_mode<synchronous>, transform_indices = @transform_5, window_bounds = array<i64: 1, 128>}, {transform_indices = @transform_6, window_bounds = array<i64: 1, 8, 128>}, {transform_indices = @transform_7, window_bounds = array<i64: 1, 8, 128>}]} {
    %c0_i32 = arith.constant 0 : i32
    %0 = arith.cmpi eq, %arg0, %c0_i32 : i32
    %1 = arith.extui %0 : i1 to i32
    %c0_i32_0 = arith.constant 0 : i32
    %2 = arith.cmpi ne, %1, %c0_i32_0 : i32
    scf.if %2 {
      %c0_24 = arith.constant 0 : index
      %c0_25 = arith.constant 0 : index
      %28 = vector.load %arg2[%c0_24, %c0_25] : memref<8x128xbf16, #tpu.memory_space<vmem>>, vector<8x128xbf16>
      %c0_26 = arith.constant 0 : index
      %c128_27 = arith.constant 128 : index
      %29 = vector.load %arg9[%c0_26, %c128_27] : memref<8x256xbf16, #tpu.memory_space<vmem>>, vector<8x128xbf16>
      tpu.vector_store %arg9[%c0_26, %c128_27], %28 {strides = array<i32>} : memref<8x256xbf16, #tpu.memory_space<vmem>>, vector<8x128xbf16>,
    } else {
    }
    %c0 = arith.constant 0 : index
    %c0_1 = arith.constant 0 : index
    %c0_2 = arith.constant 0 : index
    %3 = vector.load %arg1[%c0, %c0_1, %c0_2] : memref<1x8x128xbf16, #tpu.memory_space<vmem>>, vector<1x8x128xbf16>
    %4 = vector.shape_cast %3 : vector<1x8x128xbf16> to vector<8x128xbf16>
    %c0_3 = arith.constant 0 : index
    %c0_4 = arith.constant 0 : index
    %5 = vector.load %arg9[%c0_3, %c0_4] : memref<8x256xbf16, #tpu.memory_space<vmem>>, vector<8x128xbf16>
    tpu.vector_store %arg9[%c0_3, %c0_4], %4 {strides = array<i32>} : memref<8x256xbf16, #tpu.memory_space<vmem>>, vector<8x128xbf16>,
    %c0_5 = arith.constant 0 : index
    %c0_6 = arith.constant 0 : index
    %6 = vector.load %arg9[%c0_5, %c0_6] : memref<8x256xbf16, #tpu.memory_space<vmem>>, vector<8x256xbf16>
    %c0_7 = arith.constant 0 : index
    %c0_8 = arith.constant 0 : index
    %7 = vector.load %arg3[%c0_7, %c0_8] : memref<256x128xbf16, #tpu.memory_space<vmem>>, vector<256x128xbf16>
    %cst = arith.constant dense<0.000000e+00> : vector<8x128xf32>
    %8 = tpu.matmul %6, %7, %cst {dimension_numbers = #tpu.dot_dimension_numbers<[1], [0], [0], [1], [0, 0, 1, 1], [], []>} : vector<8x256xbf16>, vector<256x128xbf16>, vector<8x128xf32> -> vector<8x128xf32>
    %c0_9 = arith.constant 0 : index
    %c0_10 = arith.constant 0 : index
    %9 = vector.load %arg4[%c0_9, %c0_10] : memref<1x128xf32, #tpu.memory_space<vmem>>, vector<1x128xf32>
    %10 = vector.broadcast %9 : vector<1x128xf32> to vector<8x128xf32>
    %11 = arith.addf %8, %10 : vector<8x128xf32>
    %cst_11 = arith.constant 0.000000e+00 : f32
    %12 = vector.broadcast %cst_11 : f32 to vector<8x128xf32>
    %13 = arith.maximumf %11, %12 : vector<8x128xf32>
    %14 = arith.truncf %13 : vector<8x128xf32> to vector<8x128xbf16>
    %c0_12 = arith.constant 0 : index
    %c0_13 = arith.constant 0 : index
    %15 = vector.load %arg5[%c0_12, %c0_13] : memref<128x128xbf16, #tpu.memory_space<vmem>>, vector<128x128xbf16>
    %cst_14 = arith.constant dense<0.000000e+00> : vector<8x128xf32>
    %16 = tpu.matmul %14, %15, %cst_14 {dimension_numbers = #tpu.dot_dimension_numbers<[1], [0], [0], [1], [0, 0, 1, 1], [], []>} : vector<8x128xbf16>, vector<128x128xbf16>, vector<8x128xf32> -> vector<8x128xf32>
    %c0_15 = arith.constant 0 : index
    %c0_16 = arith.constant 0 : index
    %17 = vector.load %arg6[%c0_15, %c0_16] : memref<1x128xf32, #tpu.memory_space<vmem>>, vector<1x128xf32>
    %18 = vector.broadcast %17 : vector<1x128xf32> to vector<8x128xf32>
    %19 = arith.addf %16, %18 : vector<8x128xf32>
    %20 = arith.truncf %13 : vector<8x128xf32> to vector<8x128xbf16>
    %c0_17 = arith.constant 0 : index
    %c128 = arith.constant 128 : index
    %21 = vector.load %arg9[%c0_17, %c128] : memref<8x256xbf16, #tpu.memory_space<vmem>>, vector<8x128xbf16>
    tpu.vector_store %arg9[%c0_17, %c128], %20 {strides = array<i32>} : memref<8x256xbf16, #tpu.memory_space<vmem>>, vector<8x128xbf16>,
    %c0_18 = arith.constant 0 : index
    %c0_19 = arith.constant 0 : index
    %c0_20 = arith.constant 0 : index
    %22 = vector.load %arg7[%c0_18, %c0_19, %c0_20] : memref<1x8x128xf32, #tpu.memory_space<vmem>>, vector<1x8x128xf32>
    %23 = vector.shape_cast %22 : vector<1x8x128xf32> to vector<8x128xf32>
    %24 = vector.shape_cast %13 : vector<8x128xf32> to vector<1x8x128xf32>
    tpu.vector_store %arg7[%c0_18, %c0_19, %c0_20], %24 {strides = array<i32>} : memref<1x8x128xf32, #tpu.memory_space<vmem>>, vector<1x8x128xf32>,
    %c0_21 = arith.constant 0 : index
    %c0_22 = arith.constant 0 : index
    %c0_23 = arith.constant 0 : index
    %25 = vector.load %arg8[%c0_21, %c0_22, %c0_23] : memref<1x8x128xf32, #tpu.memory_space<vmem>>, vector<1x8x128xf32>
    %26 = vector.shape_cast %25 : vector<1x8x128xf32> to vector<8x128xf32>
    %27 = vector.shape_cast %19 : vector<8x128xf32> to vector<1x8x128xf32>
    tpu.vector_store %arg8[%c0_21, %c0_22, %c0_23], %27 {strides = array<i32>} : memref<1x8x128xf32, #tpu.memory_space<vmem>>, vector<1x8x128xf32>,
    return
  }
  func.func @transform_0(%arg0: i32) -> (i32, i32, i32) {
    %c0_i32 = arith.constant 0 : i32
    %c0_i32_0 = arith.constant 0 : i32
    %c0_i32_1 = arith.constant 0 : i32
    return %arg0, %c0_i32, %c0_i32_0 : i32, i32, i32
  }
  func.func @transform_1(%arg0: i32) -> (i32, i32) {
    %c0_i32 = arith.constant 0 : i32
    %c0_i32_0 = arith.constant 0 : i32
    %c0_i32_1 = arith.constant 0 : i32
    return %c0_i32, %c0_i32_0 : i32, i32
  }
  func.func @transform_2(%arg0: i32) -> (i32, i32) {
    %c0_i32 = arith.constant 0 : i32
    %c0_i32_0 = arith.constant 0 : i32
    %c0_i32_1 = arith.constant 0 : i32
    return %c0_i32, %c0_i32_0 : i32, i32
  }
  func.func @transform_3(%arg0: i32) -> (i32, i32) {
    %c0_i32 = arith.constant 0 : i32
    %c0_i32_0 = arith.constant 0 : i32
    %c0_i32_1 = arith.constant 0 : i32
    return %c0_i32, %c0_i32_0 : i32, i32
  }
  func.func @transform_4(%arg0: i32) -> (i32, i32) {
    %c0_i32 = arith.constant 0 : i32
    %c0_i32_0 = arith.constant 0 : i32
    %c0_i32_1 = arith.constant 0 : i32
    return %c0_i32, %c0_i32_0 : i32, i32
  }
  func.func @transform_5(%arg0: i32) -> (i32, i32) {
    %c0_i32 = arith.constant 0 : i32
    %c0_i32_0 = arith.constant 0 : i32
    %c0_i32_1 = arith.constant 0 : i32
    return %c0_i32, %c0_i32_0 : i32, i32
  }
  func.func @transform_6(%arg0: i32) -> (i32, i32, i32) {
    %c0_i32 = arith.constant 0 : i32
    %c0_i32_0 = arith.constant 0 : i32
    %c0_i32_1 = arith.constant 0 : i32
    return %arg0, %c0_i32, %c0_i32_0 : i32, i32, i32
  }
  func.func @transform_7(%arg0: i32) -> (i32, i32, i32) {
    %c0_i32 = arith.constant 0 : i32
    %c0_i32_0 = arith.constant 0 : i32
    %c0_i32_1 = arith.constant 0 : i32
    return %arg0, %c0_i32, %c0_i32_0 : i32, i32, i32
  }
}

</mosaic_0001>

<llo_original>
// kernel: tpu_custom_call.1
$region0: #{tpu_custom_call.1}
  #allocation0 [shape = 'u32[]', space=smem, size = 0x4, offset = 0x4, fixed_abs, tag = 'smem constant byte address 0x4 - core index']
  #allocation1 [shape = 'u32[144,128]{1,0:T(1,128)}', space=vmem, size = 0x12000, scoped, tag = 'internal scratch']
  #allocation2 [shape = 'bf16[8,256]{1,0:T(8,128)(2,1)}', space=vmem, size = 0x1000, scoped, tag = 'scratch operand']
  %s0 = inlined_call_operand.hbm [shape: bf16[6,8,128], index: 0, kind: input, shape index: {}]
  %s1 = inlined_call_operand.hbm [shape: bf16[8,128], index: 1, kind: input, shape index: {}]
  %s2 = inlined_call_operand.hbm [shape: bf16[256,128], index: 2, kind: input, shape index: {}]
  %s3 = inlined_call_operand.vmem [shape: f32[1,128], index: 3, kind: input, shape index: {}]
  %s4 = inlined_call_operand.hbm [shape: bf16[128,128], index: 4, kind: input, shape index: {}]
  %s5 = inlined_call_operand.vmem [shape: f32[1,128], index: 5, kind: input, shape index: {}]
  %s6 = inlined_call_operand.hbm [shape: f32[6,8,128], index: 6, kind: output, shape index: {0}]
  %s7 = inlined_call_operand.hbm [shape: f32[6,8,128], index: 7, kind: output, shape index: {1}]
  %8 = xla_tuple %s6, %s7
  %s9 = sld [smem:[#allocation0]]
  $region85: #{tpu_custom_call.1} parent=0
    _
  %s11 = ssub.s32 1, %s9
  %s12 = scalar_select 0, %s11, %s9
  $region1: #{tpu_custom_call.1} parent=0
    #allocation3 [shape = 'u8[4096]{0}', space=vmem, size = 0x1000, scoped, tag = 'input window, operand 0']
    #allocation4 [shape = 's32[2]{0}', space=sflag, size = 0x8, scoped, tag = 'scoped memory for tpu_custom_call.1']
    #allocation5 [shape = 's32[2]{0}', space=sflag, size = 0x8, scoped, tag = 'scoped memory for tpu_custom_call.1']
    #allocation6 [shape = 'u8[2048]{0}', space=vmem, size = 0x800, scoped, tag = 'input window, operand 1, single buffered']
    #allocation7 [shape = 's32[1]{0}', space=sflag, size = 0x4, scoped, tag = 'scoped memory for tpu_custom_call.1']
    #allocation8 [shape = 'u8[65536]{0}', space=vmem, size = 0x10000, scoped, tag = 'input window, operand 2, single buffered']
    #allocation9 [shape = 'u8[32768]{0}', space=vmem, size = 0x8000, scoped, tag = 'input window, operand 4, single buffered']
    #allocation10 [shape = 's32[1]{0}', space=sflag, size = 0x4, scoped, tag = 'scoped memory for tpu_custom_call.1']
    #allocation11 [shape = 'u8[8192]{0}', space=vmem, size = 0x2000, scoped, tag = 'output window, operand 0']
    #allocation12 [shape = 'u8[8192]{0}', space=vmem, size = 0x2000, scoped, tag = 'output window, operand 1']
    #allocation13 [shape = 's32[2]{0}', space=sflag, size = 0x8, scoped, tag = 'scoped memory for tpu_custom_call.1']
    %13 = vsyncpa [#allocation4], 0
    %s14 = scalar_lea.sflag [#allocation4], 1
    %15 = vsyncpa %s14, 0
    %16 = vsyncpa [#allocation7], 0
    %17 = vsyncpa [#allocation10], 0
    %18 = vsyncpa [#allocation5], 0
    %s19 = scalar_lea.sflag [#allocation5], 1
    %20 = vsyncpa %s19, 0
    %21 = vsyncpa [#allocation13], 0
    %s22 = scalar_lea.sflag [#allocation13], 1
    %23 = vsyncpa %s22, 0
    loop: start=0, step=1, limit=8
    $region2: #{tpu_custom_call.1} parent=1 // loop_pre_header
      _
    $region3: #{tpu_custom_call.1} parent=1 // loop_header
      %s25 = sphi 0, %s29
      %p26 = scmp.ge.s32.totalorder %s25, 8
      %s35 = sphi 0, %s37
      %s38 = sphi 0, %s35
      %s39 = sphi 0, %s38
      %s55 = sphi 0, %s39
      %s59 = sphi 0, %s59
      %s61 = sphi 0, %s59
      %s62 = sphi 0, %s61
      %s76 = sphi 0, %s62
      %s80 = sphi 0, %s80
      %s82 = sphi 0, %s80
      %s83 = sphi 0, %s82
      %s97 = sphi 0, %s83
      %s101 = sphi 0, %s101
      %s103 = sphi 0, %s101
      %s104 = sphi 0, %s103
      %s118 = sphi 0, %s104
      %s122 = sphi 0, %s122
      %s124 = sphi 0, %s122
      %s125 = sphi 0, %s124
      %s139 = sphi 0, %s125
      %s143 = sphi 0, %s143
      %s145 = sphi 0, %s143
      %s146 = sphi 0, %s145
      %s160 = sphi 0, %s146
      %s166 = sphi 0, %s168
      %s169 = sphi 0, %s166
      %s170 = sphi 0, %s169
      %s186 = sphi 0, %s170
      %s192 = sphi 0, %s194
      %s195 = sphi 0, %s192
      %s196 = sphi 0, %s195
      %s212 = sphi 0, %s196
    $region4: #{tpu_custom_call.1} parent=1 // loop_header_branch
      %28 = sbr.rel (%p26) target = $region8
    $region5: #{tpu_custom_call.1} parent=1 // loop_body
      %s30 = ssub.s32 %s25, 1
      %s31 = ssub.s32 %s25, 2
      %s32 = sadd.s32 %s25, 1
      %s33 = ssub.s32 %s25, %s32
      %p34 = scmp.eq.s32.totalorder %s33, 0
      %s36 = sadd.s32 %s35, 1
      %s37 = scalar_select %p34, %s35, %s36
      %p40 = pneg %p34
      %p41 = scmp.eq.s32.totalorder %s25, 5
      %p42 = por %p40, %p41
      %p43 = scmp.ne.s32.totalorder %s35, %s38
      %p44 = scmp.eq.s32.totalorder %s25, 0
      %p45 = por %p43, %p44
      %p46 = scmp.ne.s32.totalorder %s35, %s38
      %p47 = scmp.eq.s32.totalorder %s30, 5
      %p48 = por %p46, %p47
      %p49 = scmp.ne.s32.totalorder %s38, %s39
      %p50 = scmp.eq.s32.totalorder %s30, 0
      %p51 = por %p49, %p50
      %p52 = scmp.ne.s32.totalorder %s38, %s39
      %p53 = scmp.eq.s32.totalorder %s31, 5
      %p54 = por %p52, %p53
      %p56 = scmp.ne.s32.totalorder %s39, %s55
      %p57 = scmp.eq.s32.totalorder %s31, 0
      %p58 = por %p56, %p57
      %s60 = sadd.s32 %s59, 1
      %p63 = scmp.eq.s32.totalorder %s25, 5
      %p64 = scmp.ne.s32.totalorder %s59, %s61
      %p65 = scmp.eq.s32.totalorder %s25, 0
      %p66 = por %p64, %p65
      %p67 = scmp.ne.s32.totalorder %s59, %s61
      %p68 = scmp.eq.s32.totalorder %s30, 5
      %p69 = por %p67, %p68
      %p70 = scmp.ne.s32.totalorder %s61, %s62
      %p71 = scmp.eq.s32.totalorder %s30, 0
      %p72 = por %p70, %p71
      %p73 = scmp.ne.s32.totalorder %s61, %s62
      %p74 = scmp.eq.s32.totalorder %s31, 5
      %p75 = por %p73, %p74
      %p77 = scmp.ne.s32.totalorder %s62, %s76
      %p78 = scmp.eq.s32.totalorder %s31, 0
      %p79 = por %p77, %p78
      %s81 = sadd.s32 %s80, 1
      %p84 = scmp.eq.s32.totalorder %s25, 5
      %p85 = scmp.ne.s32.totalorder %s80, %s82
      %p86 = scmp.eq.s32.totalorder %s25, 0
      %p87 = por %p85, %p86
      %p88 = scmp.ne.s32.totalorder %s80, %s82
      %p89 = scmp.eq.s32.totalorder %s30, 5
      %p90 = por %p88, %p89
      %p91 = scmp.ne.s32.totalorder %s82, %s83
      %p92 = scmp.eq.s32.totalorder %s30, 0
      %p93 = por %p91, %p92
      %p94 = scmp.ne.s32.totalorder %s82, %s83
      %p95 = scmp.eq.s32.totalorder %s31, 5
      %p96 = por %p94, %p95
      %p98 = scmp.ne.s32.totalorder %s83, %s97
      %p99 = scmp.eq.s32.totalorder %s31, 0
      %p100 = por %p98, %p99
      %s102 = sadd.s32 %s101, 1
      %p105 = scmp.eq.s32.totalorder %s25, 5
      %p106 = scmp.ne.s32.totalorder %s101, %s103
      %p107 = scmp.eq.s32.totalorder %s25, 0
      %p108 = por %p106, %p107
      %p109 = scmp.ne.s32.totalorder %s101, %s103
      %p110 = scmp.eq.s32.totalorder %s30, 5
      %p111 = por %p109, %p110
      %p112 = scmp.ne.s32.totalorder %s103, %s104
      %p113 = scmp.eq.s32.totalorder %s30, 0
      %p114 = por %p112, %p113
      %p115 = scmp.ne.s32.totalorder %s103, %s104
      %p116 = scmp.eq.s32.totalorder %s31, 5
      %p117 = por %p115, %p116
      %p119 = scmp.ne.s32.totalorder %s104, %s118
      %p120 = scmp.eq.s32.totalorder %s31, 0
      %p121 = por %p119, %p120
      %s123 = sadd.s32 %s122, 1
      %p126 = scmp.eq.s32.totalorder %s25, 5
      %p127 = scmp.ne.s32.totalorder %s122, %s124
      %p128 = scmp.eq.s32.totalorder %s25, 0
      %p129 = por %p127, %p128
      %p130 = scmp.ne.s32.totalorder %s122, %s124
      %p131 = scmp.eq.s32.totalorder %s30, 5
      %p132 = por %p130, %p131
      %p133 = scmp.ne.s32.totalorder %s124, %s125
      %p134 = scmp.eq.s32.totalorder %s30, 0
      %p135 = por %p133, %p134
      %p136 = scmp.ne.s32.totalorder %s124, %s125
      %p137 = scmp.eq.s32.totalorder %s31, 5
      %p138 = por %p136, %p137
      %p140 = scmp.ne.s32.totalorder %s125, %s139
      %p141 = scmp.eq.s32.totalorder %s31, 0
      %p142 = por %p140, %p141
      %s144 = sadd.s32 %s143, 1
      %p147 = scmp.eq.s32.totalorder %s25, 5
      %p148 = scmp.ne.s32.totalorder %s143, %s145
      %p149 = scmp.eq.s32.totalorder %s25, 0
      %p150 = por %p148, %p149
      %p151 = scmp.ne.s32.totalorder %s143, %s145
      %p152 = scmp.eq.s32.totalorder %s30, 5
      %p153 = por %p151, %p152
      %p154 = scmp.ne.s32.totalorder %s145, %s146
      %p155 = scmp.eq.s32.totalorder %s30, 0
      %p156 = por %p154, %p155
      %p157 = scmp.ne.s32.totalorder %s145, %s146
      %p158 = scmp.eq.s32.totalorder %s31, 5
      %p159 = por %p157, %p158
      %p161 = scmp.ne.s32.totalorder %s146, %s160
      %p162 = scmp.eq.s32.totalorder %s31, 0
      %p163 = por %p161, %p162
      %s164 = ssub.s32 %s25, %s32
      %p165 = scmp.eq.s32.totalorder %s164, 0
      %s167 = sadd.s32 %s166, 1
      %s168 = scalar_select %p165, %s166, %s167
      %p171 = pneg %p165
      %p172 = scmp.eq.s32.totalorder %s25, 5
      %p173 = por %p171, %p172
      %p174 = scmp.ne.s32.totalorder %s166, %s169
      %p175 = scmp.eq.s32.totalorder %s25, 0
      %p176 = por %p174, %p175
      %p177 = scmp.ne.s32.totalorder %s166, %s169
      %p178 = scmp.eq.s32.totalorder %s30, 5
      %p179 = por %p177, %p178
      %p180 = scmp.ne.s32.totalorder %s169, %s170
      %p181 = scmp.eq.s32.totalorder %s30, 0
      %p182 = por %p180, %p181
      %p183 = scmp.ne.s32.totalorder %s169, %s170
      %p184 = scmp.eq.s32.totalorder %s31, 5
      %p185 = por %p183, %p184
      %p187 = scmp.ne.s32.totalorder %s170, %s186
      %p188 = scmp.eq.s32.totalorder %s31, 0
      %p189 = por %p187, %p188
      %s190 = ssub.s32 %s25, %s32
      %p191 = scmp.eq.s32.totalorder %s190, 0
      %s193 = sadd.s32 %s192, 1
      %s194 = scalar_select %p191, %s192, %s193
      %p197 = pneg %p191
      %p198 = scmp.eq.s32.totalorder %s25, 5
      %p199 = por %p197, %p198
      %p200 = scmp.ne.s32.totalorder %s192, %s195
      %p201 = scmp.eq.s32.totalorder %s25, 0
      %p202 = por %p200, %p201
      %p203 = scmp.ne.s32.totalorder %s192, %s195
      %p204 = scmp.eq.s32.totalorder %s30, 5
      %p205 = por %p203, %p204
      %p206 = scmp.ne.s32.totalorder %s195, %s196
      %p207 = scmp.eq.s32.totalorder %s30, 0
      %p208 = por %p206, %p207
      %p209 = scmp.ne.s32.totalorder %s195, %s196
      %p210 = scmp.eq.s32.totalorder %s31, 5
      %p211 = por %p209, %p210
      %p213 = scmp.ne.s32.totalorder %s196, %s212
      %p214 = scmp.eq.s32.totalorder %s31, 0
      %p215 = por %p213, %p214
      %p216 = scmp.le.s32.totalorder 1, %s25
      %p217 = scmp.lt.s32.totalorder %s25, 7
      %p218 = pnand %p216, %p217
      %p219 = pneg %p218
      // Predicated region
      $region9: #{tpu_custom_call.1} parent=5 // pred_check
        _
      $region10: #{tpu_custom_call.1} parent=5 // pred_check_branch
        %221 = sbr.rel (%p218) target = $region12
      $region11: #{tpu_custom_call.1} parent=5 // pred_region
        %s222 = ssub.s32 %s25, 1
        // Predicated region
        $region13: #{tpu_custom_call.1} parent=11 // pred_check
          %p223 = pneg %p72
        $region14: #{tpu_custom_call.1} parent=11 // pred_check_branch
          %225 = sbr.rel (%p223) target = $region16
        $region15: #{tpu_custom_call.1} parent=11 // pred_region
          %s227 = ssub.s32 64, 64
          %228 = vsyncadd [#allocation7], %s227
          %s230 = sshll.u32 [#allocation6], 4
          %s231 = int_to_ptr.vmem [resolvable:$true] %s230
          %233 = dma.hbm_to_vmem [thread:$0]  %s1, 64, %s231, [#allocation7]
        $region16: #{tpu_custom_call.1} parent=11 // pred_fallthru
          _
        // Predicated region
        $region17: #{tpu_custom_call.1} parent=11 // pred_check
          %p234 = pneg %p93
        $region18: #{tpu_custom_call.1} parent=11 // pred_check_branch
          %236 = sbr.rel (%p234) target = $region20
        $region19: #{tpu_custom_call.1} parent=11 // pred_region
          %s238 = ssub.s32 2048, 2048
          %239 = vsyncadd [#allocation7], %s238
          %s240 = sshll.u32 [#allocation8], 4
          %s241 = int_to_ptr.vmem [resolvable:$true] %s240
          %246 = dma.hbm_to_vmem [thread:$0]  %s2, 2048, %s241, [#allocation7], 64, 64, 4
        $region20: #{tpu_custom_call.1} parent=11 // pred_fallthru
          _
        // Predicated region
        $region21: #{tpu_custom_call.1} parent=11 // pred_check
          %p247 = pneg %p114
        $region22: #{tpu_custom_call.1} parent=11 // pred_check_branch
          %249 = sbr.rel (%p247) target = $region24
        $region23: #{tpu_custom_call.1} parent=11 // pred_region
          _
        $region24: #{tpu_custom_call.1} parent=11 // pred_fallthru
          _
        // Predicated region
        $region25: #{tpu_custom_call.1} parent=11 // pred_check
          %p250 = pneg %p135
        $region26: #{tpu_custom_call.1} parent=11 // pred_check_branch
          %252 = sbr.rel (%p250) target = $region28
        $region27: #{tpu_custom_call.1} parent=11 // pred_region
          %s254 = ssub.s32 1024, 1024
          %255 = vsyncadd [#allocation10], %s254
          %s256 = sshll.u32 [#allocation9], 4
          %s257 = int_to_ptr.vmem [resolvable:$true] %s256
          %262 = dma.hbm_to_vmem [thread:$0]  %s4, 1024, %s257, [#allocation10], 64, 64, 4
        $region28: #{tpu_custom_call.1} parent=11 // pred_fallthru
          _
        // Predicated region
        $region29: #{tpu_custom_call.1} parent=11 // pred_check
          %p263 = pneg %p156
        $region30: #{tpu_custom_call.1} parent=11 // pred_check_branch
          %265 = sbr.rel (%p263) target = $region32
        $region31: #{tpu_custom_call.1} parent=11 // pred_region
          _
        $region32: #{tpu_custom_call.1} parent=11 // pred_fallthru
          _
      $region12: #{tpu_custom_call.1} parent=5 // pred_fallthru
        _
      %p266 = scmp.lt.s32.totalorder %s25, 6
      // Predicated region
      $region33: #{tpu_custom_call.1} parent=5 // pred_check
        %p267 = pneg %p266
      $region34: #{tpu_custom_call.1} parent=5 // pred_check_branch
        %269 = sbr.rel (%p267) target = $region36
      $region35: #{tpu_custom_call.1} parent=5 // pred_region
        // Predicated region
        $region37: #{tpu_custom_call.1} parent=35 // pred_check
          %p270 = pneg %p45
        $region38: #{tpu_custom_call.1} parent=35 // pred_check_branch
          %272 = sbr.rel (%p270) target = $region40
        $region39: #{tpu_custom_call.1} parent=35 // pred_region
          %s273 = sand.u32 %s35, 1
          %s274 = scalar_lea.sflag [#allocation4], %s273
          %s275 = sand.u32 %s35, 1
          %s276 = smul.addr %s275, 4
          %s277 = scalar_lea.vmem [#allocation3], %s276
          %s279 = ssub.s32 64, 64
          %280 = vsyncadd %s274, %s279
          %s281 = smul.addr %s25, 64
          %s282 = scalar_lea.hbm %s0, %s281
          %s284 = sshll.u32 %s277, 4
          %s285 = int_to_ptr.vmem [resolvable:$true] %s284
          %287 = dma.hbm_to_vmem [thread:$0]  %s282, 64, %s285, %s274
        $region40: #{tpu_custom_call.1} parent=35 // pred_fallthru
          _
      $region36: #{tpu_custom_call.1} parent=5 // pred_fallthru
        _
      %p288 = scmp.le.s32.totalorder 1, %s25
      %p289 = scmp.lt.s32.totalorder %s25, 7
      %p290 = pnand %p288, %p289
      %p291 = pneg %p290
      // Predicated region
      $region41: #{tpu_custom_call.1} parent=5 // pred_check
        _
      $region42: #{tpu_custom_call.1} parent=5 // pred_check_branch
        %293 = sbr.rel (%p290) target = $region44
      $region43: #{tpu_custom_call.1} parent=5 // pred_region
        %s294 = ssub.s32 %s25, 1
        %s295 = sand.u32 %s38, 1
        %s296 = scalar_lea.sflag [#allocation4], %s295
        %s297 = sand.u32 %s38, 1
        %s298 = smul.addr %s297, 4
        %s299 = scalar_lea.vmem [#allocation3], %s298
        // Predicated region
        $region45: #{tpu_custom_call.1} parent=43 // pred_check
          %p300 = pneg %p51
        $region46: #{tpu_custom_call.1} parent=43 // pred_check_branch
          %302 = sbr.rel (%p300) target = $region48
        $region47: #{tpu_custom_call.1} parent=43 // pred_region
          %303 = dma.done %s296, 64
        $region48: #{tpu_custom_call.1} parent=43 // pred_fallthru
          _
        // Predicated region
        $region49: #{tpu_custom_call.1} parent=43 // pred_check
          %p304 = pneg %p72
        $region50: #{tpu_custom_call.1} parent=43 // pred_check_branch
          %306 = sbr.rel (%p304) target = $region52
        $region51: #{tpu_custom_call.1} parent=43 // pred_region
          %307 = dma.done [#allocation7], 64
        $region52: #{tpu_custom_call.1} parent=43 // pred_fallthru
          _
        // Predicated region
        $region53: #{tpu_custom_call.1} parent=43 // pred_check
          %p308 = pneg %p93
        $region54: #{tpu_custom_call.1} parent=43 // pred_check_branch
          %310 = sbr.rel (%p308) target = $region56
        $region55: #{tpu_custom_call.1} parent=43 // pred_region
          %311 = dma.done [#allocation7], 2048
        $region56: #{tpu_custom_call.1} parent=43 // pred_fallthru
          _
        // Predicated region
        $region57: #{tpu_custom_call.1} parent=43 // pred_check
          %p312 = pneg %p135
        $region58: #{tpu_custom_call.1} parent=43 // pred_check_branch
          %314 = sbr.rel (%p312) target = $region60
        $region59: #{tpu_custom_call.1} parent=43 // pred_region
          %315 = dma.done [#allocation10], 1024
        $region60: #{tpu_custom_call.1} parent=43 // pred_fallthru
          _
        %s316 = sand.u32 %s38, 1
        %s317 = scalar_lea.sflag [#allocation4], %s316
        %s318 = sand.u32 %s38, 1
        %s319 = smul.addr %s318, 4
        %s320 = scalar_lea.vmem [#allocation3], %s319
        %p321 = pneg %p51
        %p322 = pneg %p48
        %p323 = pneg %p72
        %p324 = pneg %p69
        %p325 = pneg %p93
        %p326 = pneg %p90
        %p327 = pneg %p114
        %p328 = pneg %p111
        %p329 = pneg %p135
        %p330 = pneg %p132
        %p331 = pneg %p156
        %p332 = pneg %p153
        %p333 = pneg %p182
        %p334 = pneg %p179
        %s335 = sand.u32 %s169, 1
        %s336 = scalar_lea.sflag [#allocation5], %s335
        %s337 = sand.u32 %s169, 1
        %s338 = smul.addr %s337, 8
        %s339 = scalar_lea.vmem [#allocation11], %s338
        %p340 = pneg %p208
        %p341 = pneg %p205
        %s342 = sand.u32 %s195, 1
        %s343 = scalar_lea.sflag [#allocation13], %s342
        %s344 = sand.u32 %s195, 1
        %s345 = smul.addr %s344, 8
        %s346 = scalar_lea.vmem [#allocation12], %s345
        %p348 = scmp.eq.s32.totalorder %s30, 0
        // Predicated region
        $region61: #{tpu_custom_call.1} parent=43 // pred_check
          %p349 = pneg %p348
        $region62: #{tpu_custom_call.1} parent=43 // pred_check_branch
          %351 = sbr.rel (%p349) target = $region64
        $region63: #{tpu_custom_call.1} parent=43 // pred_region
          %v352 = vld [vmem:[#allocation6] sm:$0xf]
          %353 = vst [vmem:[#allocation2 + $0x4] sm:$0xf] %v352
        $region64: #{tpu_custom_call.1} parent=43 // pred_fallthru
          _
        %v354 = vld [vmem:[%s299] sm:$0xf]
        %355 = vst [vmem:[#allocation2] sm:$0xf] %v354
        %v356 = vld [vmem:[#allocation2] sm:$0xff]
        %v357 = vld [vmem:[#allocation8] sm:$0xf]
        %v358 = vld [vmem:[#allocation8 + $0x4] sm:$0xf]
        %v359 = vld [vmem:[#allocation8 + $0x8] sm:$0xf]
        %v360 = vld [vmem:[#allocation8 + $0xc] sm:$0xf]
        %v361 = vld [vmem:[#allocation8 + $0x10] sm:$0xf]
        %v362 = vld [vmem:[#allocation8 + $0x14] sm:$0xf]
        %v363 = vld [vmem:[#allocation8 + $0x18] sm:$0xf]
        %v364 = vld [vmem:[#allocation8 + $0x1c] sm:$0xf]
        %v365 = vld [vmem:[#allocation8 + $0x20] sm:$0xf]
        %v366 = vld [vmem:[#allocation8 + $0x24] sm:$0xf]
        %v367 = vld [vmem:[#allocation8 + $0x28] sm:$0xf]
        %v368 = vld [vmem:[#allocation8 + $0x2c] sm:$0xf]
        %v369 = vld [vmem:[#allocation8 + $0x30] sm:$0xf]
        %v370 = vld [vmem:[#allocation8 + $0x34] sm:$0xf]
        %v371 = vld [vmem:[#allocation8 + $0x38] sm:$0xf]
        %v372 = vld [vmem:[#allocation8 + $0x3c] sm:$0xf]
        %v373 = vld [vmem:[#allocation8 + $0x40] sm:$0xf]
        %v374 = vld [vmem:[#allocation8 + $0x44] sm:$0xf]
        %v375 = vld [vmem:[#allocation8 + $0x48] sm:$0xf]
        %v376 = vld [vmem:[#allocation8 + $0x4c] sm:$0xf]
        %v377 = vld [vmem:[#allocation8 + $0x50] sm:$0xf]
        %v378 = vld [vmem:[#allocation8 + $0x54] sm:$0xf]
        %v379 = vld [vmem:[#allocation8 + $0x58] sm:$0xf]
        %v380 = vld [vmem:[#allocation8 + $0x5c] sm:$0xf]
        %v381 = vld [vmem:[#allocation8 + $0x60] sm:$0xf]
        %v382 = vld [vmem:[#allocation8 + $0x64] sm:$0xf]
        %v383 = vld [vmem:[#allocation8 + $0x68] sm:$0xf]
        %v384 = vld [vmem:[#allocation8 + $0x6c] sm:$0xf]
        %v385 = vld [vmem:[#allocation8 + $0x70] sm:$0xf]
        %v386 = vld [vmem:[#allocation8 + $0x74] sm:$0xf]
        %v387 = vld [vmem:[#allocation8 + $0x78] sm:$0xf]
        %v388 = vld [vmem:[#allocation8 + $0x7c] sm:$0xf]
        %v389 = vld [vmem:[%s3] sm:$0x1]
        %v391 = vlaneseq
        %v392 = vshrl.u32 %v391, 7
        %v393 = vsub.s32 0, %v392
        %v394 = vrot.slane %v389, %v393
        %v397 = vunpack.c.l.b16 %v356
        %v398 = vunpack.c.h.b16 %v356
        %v399 = vpack.c.b16 %v397, %v397
        %v400 = vpack.c.b16 %v398, %v398
        %v435 = vunpack.c.l.b16 %v357
        %v436 = vunpack.c.l.b16 %v358
        %v437 = vunpack.c.l.b16 %v359
        %v438 = vunpack.c.l.b16 %v360
        %v439 = vunpack.c.l.b16 %v361
        %v440 = vunpack.c.l.b16 %v362
        %v441 = vunpack.c.l.b16 %v363
        %v442 = vunpack.c.l.b16 %v364
        %v443 = vunpack.c.l.b16 %v365
        %v444 = vunpack.c.l.b16 %v366
        %v445 = vunpack.c.l.b16 %v367
        %v446 = vunpack.c.l.b16 %v368
        %v447 = vunpack.c.l.b16 %v369
        %v448 = vunpack.c.l.b16 %v370
        %v449 = vunpack.c.l.b16 %v371
        %v450 = vunpack.c.l.b16 %v372
        %v451 = vunpack.c.l.b16 %v373
        %v452 = vunpack.c.l.b16 %v374
        %v453 = vunpack.c.l.b16 %v375
        %v454 = vunpack.c.l.b16 %v376
        %v455 = vunpack.c.l.b16 %v377
        %v456 = vunpack.c.l.b16 %v378
        %v457 = vunpack.c.l.b16 %v379
        %v458 = vunpack.c.l.b16 %v380
        %v459 = vunpack.c.l.b16 %v381
        %v460 = vunpack.c.l.b16 %v382
        %v461 = vunpack.c.l.b16 %v383
        %v462 = vunpack.c.l.b16 %v384
        %v463 = vunpack.c.l.b16 %v385
        %v464 = vunpack.c.l.b16 %v386
        %v465 = vunpack.c.l.b16 %v387
        %v466 = vunpack.c.l.b16 %v388
        %v467 = vpack.c.b16 %v436, %v435
        %v468 = vpack.c.b16 %v438, %v437
        %v469 = vpack.c.b16 %v440, %v439
        %v470 = vpack.c.b16 %v442, %v441
        %v471 = vpack.c.b16 %v444, %v443
        %v472 = vpack.c.b16 %v446, %v445
        %v473 = vpack.c.b16 %v448, %v447
        %v474 = vpack.c.b16 %v450, %v449
        %v475 = vpack.c.b16 %v452, %v451
        %v476 = vpack.c.b16 %v454, %v453
        %v477 = vpack.c.b16 %v456, %v455
        %v478 = vpack.c.b16 %v458, %v457
        %v479 = vpack.c.b16 %v460, %v459
        %v480 = vpack.c.b16 %v462, %v461
        %v481 = vpack.c.b16 %v464, %v463
        %v482 = vpack.c.b16 %v466, %v465
        %499 = vmatprep.subr.bf16.mxu0 0
        %500 = vmatpush1.bf16.msra.mxu0 %v467
        %501 = vmatprep.subr.bf16.mxu0 0
        %502 = vmatpush1.bf16.msra.mxu0 %v468
        %503 = vmatprep.subr.bf16.mxu0 0
        %504 = vmatpush1.bf16.msra.mxu0 %v469
        %505 = vmatprep.subr.bf16.mxu0 0
        %506 = vmatpush1.bf16.msra.mxu0 %v470
        %507 = vmatprep.subr.bf16.mxu0 0
        %508 = vmatpush1.bf16.msra.mxu0 %v471
        %509 = vmatprep.subr.bf16.mxu0 0
        %510 = vmatpush1.bf16.msra.mxu0 %v472
        %511 = vmatprep.subr.bf16.mxu0 0
        %512 = vmatpush1.bf16.msra.mxu0 %v473
        %513 = vmatprep.subr.bf16.mxu0 0
        %514 = vmatpush1.bf16.msra.mxu0 %v474
        %515 = vmatprep.subr.bf16.mxu0 0
        %516 = vmatpush1.bf16.msra.mxu0 %v475
        %517 = vmatprep.subr.bf16.mxu0 0
        %518 = vmatpush1.bf16.msra.mxu0 %v476
        %519 = vmatprep.subr.bf16.mxu0 0
        %520 = vmatpush1.bf16.msra.mxu0 %v477
        %521 = vmatprep.subr.bf16.mxu0 0
        %522 = vmatpush1.bf16.msra.mxu0 %v478
        %523 = vmatprep.subr.bf16.mxu0 0
        %524 = vmatpush1.bf16.msra.mxu0 %v479
        %525 = vmatprep.subr.bf16.mxu0 0
        %526 = vmatpush1.bf16.msra.mxu0 %v480
        %527 = vmatprep.subr.bf16.mxu0 0
        %528 = vmatpush1.bf16.msra.mxu0 %v481
        %529 = vmatprep.subr.bf16.mxu0 0
        %530 = vmatpush1.bf16.msra.mxu0 %v482
        %531 = vmatprep.mubr.bf16.mxu0 %v400
        %532 = vmatmul.mubr.bf16.gmra.mrb[0].mxu0 %v399
        %v533 = vpop.f32.mrb[0].mxu0
        %v534 = vadd.f32 %v394, %v533
        %v535 = vpop.f32.mrb[0].mxu0
        %v536 = vpop.f32.mrb[0].mxu0
        %v537 = vpop.f32.mrb[0].mxu0
        %538 = vdwg.mxu0
        %v539 = vmax.f32 %v534, 0.0
        %v540 = vpack.c.bf16 %v539, %v539
        %v541 = vld [vmem:[#allocation9] sm:$0xf]
        %v542 = vld [vmem:[#allocation9 + $0x4] sm:$0xf]
        %v543 = vld [vmem:[#allocation9 + $0x8] sm:$0xf]
        %v544 = vld [vmem:[#allocation9 + $0xc] sm:$0xf]
        %v545 = vld [vmem:[#allocation9 + $0x10] sm:$0xf]
        %v546 = vld [vmem:[#allocation9 + $0x14] sm:$0xf]
        %v547 = vld [vmem:[#allocation9 + $0x18] sm:$0xf]
        %v548 = vld [vmem:[#allocation9 + $0x1c] sm:$0xf]
        %v549 = vld [vmem:[#allocation9 + $0x20] sm:$0xf]
        %v550 = vld [vmem:[#allocation9 + $0x24] sm:$0xf]
        %v551 = vld [vmem:[#allocation9 + $0x28] sm:$0xf]
        %v552 = vld [vmem:[#allocation9 + $0x2c] sm:$0xf]
        %v553 = vld [vmem:[#allocation9 + $0x30] sm:$0xf]
        %v554 = vld [vmem:[#allocation9 + $0x34] sm:$0xf]
        %v555 = vld [vmem:[#allocation9 + $0x38] sm:$0xf]
        %v556 = vld [vmem:[#allocation9 + $0x3c] sm:$0xf]
        %v557 = vld [vmem:[%s5] sm:$0x1]
        %v559 = vlaneseq
        %v560 = vshrl.u32 %v559, 7
        %v561 = vsub.s32 0, %v560
        %v562 = vrot.slane %v557, %v561
        %v580 = vunpack.c.l.b16 %v541
        %v581 = vunpack.c.l.b16 %v542
        %v582 = vunpack.c.l.b16 %v543
        %v583 = vunpack.c.l.b16 %v544
        %v584 = vunpack.c.l.b16 %v545
        %v585 = vunpack.c.l.b16 %v546
        %v586 = vunpack.c.l.b16 %v547
        %v587 = vunpack.c.l.b16 %v548
        %v588 = vunpack.c.l.b16 %v549
        %v589 = vunpack.c.l.b16 %v550
        %v590 = vunpack.c.l.b16 %v551
        %v591 = vunpack.c.l.b16 %v552
        %v592 = vunpack.c.l.b16 %v553
        %v593 = vunpack.c.l.b16 %v554
        %v594 = vunpack.c.l.b16 %v555
        %v595 = vunpack.c.l.b16 %v556
        %v596 = vpack.c.b16 %v581, %v580
        %v597 = vpack.c.b16 %v583, %v582
        %v598 = vpack.c.b16 %v585, %v584
        %v599 = vpack.c.b16 %v587, %v586
        %v600 = vpack.c.b16 %v589, %v588
        %v601 = vpack.c.b16 %v591, %v590
        %v602 = vpack.c.b16 %v593, %v592
        %v603 = vpack.c.b16 %v595, %v594
        %612 = vmatprep.subr.bf16.mxu0 0
        %613 = vmatpush1.bf16.msra.mxu0 %v596
        %614 = vmatprep.subr.bf16.mxu0 0
        %615 = vmatpush1.bf16.msra.mxu0 %v597
        %616 = vmatprep.subr.bf16.mxu0 0
        %617 = vmatpush1.bf16.msra.mxu0 %v598
        %618 = vmatprep.subr.bf16.mxu0 0
        %619 = vmatpush1.bf16.msra.mxu0 %v599
        %620 = vmatprep.subr.bf16.mxu0 0
        %621 = vmatpush1.bf16.msra.mxu0 %v600
        %622 = vmatprep.subr.bf16.mxu0 0
        %623 = vmatpush1.bf16.msra.mxu0 %v601
        %624 = vmatprep.subr.bf16.mxu0 0
        %625 = vmatpush1.bf16.msra.mxu0 %v602
        %626 = vmatprep.subr.bf16.mxu0 0
        %627 = vmatpush1.bf16.msra.mxu0 %v603
        %628 = vmatprep.subr.bf16.mxu0 0
        %629 = vmatpush1.bf16.msra.mxu0 0
        %630 = vmatprep.subr.bf16.mxu0 0
        %631 = vmatpush1.bf16.msra.mxu0 0
        %632 = vmatprep.subr.bf16.mxu0 0
        %633 = vmatpush1.bf16.msra.mxu0 0
        %634 = vmatprep.subr.bf16.mxu0 0
        %635 = vmatpush1.bf16.msra.mxu0 0
        %636 = vmatprep.subr.bf16.mxu0 0
        %637 = vmatpush1.bf16.msra.mxu0 0
        %638 = vmatprep.subr.bf16.mxu0 0
        %639 = vmatpush1.bf16.msra.mxu0 0
        %640 = vmatprep.subr.bf16.mxu0 0
        %641 = vmatpush1.bf16.msra.mxu0 0
        %642 = vmatprep.subr.bf16.mxu0 0
        %643 = vmatpush1.bf16.msra.mxu0 0
        %644 = vmatprep.mubr.bf16.mxu0 0
        %645 = vmatmul.mubr.bf16.gmra.mrb[0].mxu0 %v540
        %v646 = vpop.f32.mrb[0].mxu0
        %v647 = vadd.f32 %v562, %v646
        %v648 = vpop.f32.mrb[0].mxu0
        %v649 = vpop.f32.mrb[0].mxu0
        %v650 = vpop.f32.mrb[0].mxu0
        %651 = vdwg.mxu0
        %652 = vst [vmem:[#allocation2 + $0x4] sm:$0xf] %v540
        %653 = vst [vmem:[%s339] sm:$0xff] %v539
        %654 = vst [vmem:[%s346] sm:$0xff] %v647
        %s655 = sand.u32 %s169, 1
        %s656 = scalar_lea.sflag [#allocation5], %s655
        %s657 = sand.u32 %s169, 1
        %s658 = smul.addr %s657, 8
        %s659 = scalar_lea.vmem [#allocation11], %s658
        %s660 = sand.u32 %s195, 1
        %s661 = scalar_lea.sflag [#allocation13], %s660
        %s662 = sand.u32 %s195, 1
        %s663 = smul.addr %s662, 8
        %s664 = scalar_lea.vmem [#allocation12], %s663
        // Predicated region
        $region65: #{tpu_custom_call.1} parent=43 // pred_check
          %p665 = pneg %p179
        $region66: #{tpu_custom_call.1} parent=43 // pred_check_branch
          %667 = sbr.rel (%p665) target = $region68
        $region67: #{tpu_custom_call.1} parent=43 // pred_region
          %s669 = ssub.s32 128, 128
          %670 = vsyncadd %s656, %s669
          %s671 = smul.addr %s30, 128
          %s672 = scalar_lea.hbm %s6, %s671
          %s674 = sshll.u32 %s659, 4
          %s675 = int_to_ptr.vmem [resolvable:$true] %s674
          %677 = dma.vmem_to_hbm [thread:$0]  %s675, 128, %s672, %s656
        $region68: #{tpu_custom_call.1} parent=43 // pred_fallthru
          _
        // Predicated region
        $region69: #{tpu_custom_call.1} parent=43 // pred_check
          %p678 = pneg %p205
        $region70: #{tpu_custom_call.1} parent=43 // pred_check_branch
          %680 = sbr.rel (%p678) target = $region72
        $region71: #{tpu_custom_call.1} parent=43 // pred_region
          %s682 = ssub.s32 128, 128
          %683 = vsyncadd %s661, %s682
          %s684 = smul.addr %s30, 128
          %s685 = scalar_lea.hbm %s7, %s684
          %s687 = sshll.u32 %s664, 4
          %s688 = int_to_ptr.vmem [resolvable:$true] %s687
          %690 = dma.vmem_to_hbm [thread:$0]  %s688, 128, %s685, %s661
        $region72: #{tpu_custom_call.1} parent=43 // pred_fallthru
          _
      $region44: #{tpu_custom_call.1} parent=5 // pred_fallthru
        _
      %p691 = scmp.le.s32.totalorder 2, %s25
      // Predicated region
      $region73: #{tpu_custom_call.1} parent=5 // pred_check
        %p692 = pneg %p691
      $region74: #{tpu_custom_call.1} parent=5 // pred_check_branch
        %694 = sbr.rel (%p692) target = $region76
      $region75: #{tpu_custom_call.1} parent=5 // pred_region
        %s695 = ssub.s32 %s25, 2
        // Predicated region
        $region77: #{tpu_custom_call.1} parent=75 // pred_check
          %p696 = pneg %p185
        $region78: #{tpu_custom_call.1} parent=75 // pred_check_branch
          %698 = sbr.rel (%p696) target = $region80
        $region79: #{tpu_custom_call.1} parent=75 // pred_region
          %s699 = sand.u32 %s170, 1
          %s700 = scalar_lea.sflag [#allocation5], %s699
          %s701 = sand.u32 %s170, 1
          %s702 = smul.addr %s701, 8
          %s703 = scalar_lea.vmem [#allocation11], %s702
          %704 = dma.done %s700, 128
        $region80: #{tpu_custom_call.1} parent=75 // pred_fallthru
          _
        // Predicated region
        $region81: #{tpu_custom_call.1} parent=75 // pred_check
          %p705 = pneg %p211
        $region82: #{tpu_custom_call.1} parent=75 // pred_check_branch
          %707 = sbr.rel (%p705) target = $region84
        $region83: #{tpu_custom_call.1} parent=75 // pred_region
          %s708 = sand.u32 %s196, 1
          %s709 = scalar_lea.sflag [#allocation13], %s708
          %s710 = sand.u32 %s196, 1
          %s711 = smul.addr %s710, 8
          %s712 = scalar_lea.vmem [#allocation12], %s711
          %713 = dma.done %s709, 128
        $region84: #{tpu_custom_call.1} parent=75 // pred_fallthru
          _
      $region76: #{tpu_custom_call.1} parent=5 // pred_fallthru
        _
    $region6: #{tpu_custom_call.1} parent=1 // loop_footer
      %s29 = sadd.s32 1, %s25
    $region7: #{tpu_custom_call.1} parent=1 // loop_footer_branch
      %24 = sbr.rel target = $region3
    $region8: #{tpu_custom_call.1} parent=1 // loop_exit
      _
    %714 = vsyncpa [#allocation4], 1
    %s715 = scalar_lea.sflag [#allocation4], 1
    %716 = vsyncpa %s715, 1
    %717 = vsyncpa [#allocation7], 1
    %718 = vsyncpa [#allocation10], 1
    %719 = vsyncpa [#allocation5], 1
    %s720 = scalar_lea.sflag [#allocation5], 1
    %721 = vsyncpa %s720, 1
    %722 = vsyncpa [#allocation13], 1
    %s723 = scalar_lea.sflag [#allocation13], 1
    %724 = vsyncpa %s723, 1

</llo_original>
